<compile_context>
chip_gen: v7x
topology: tpu7x:2x2x1
jax: 0.10.0
libtpu: 0.0.40
codegen_flags: <defaults>
</compile_context>

<pallas_src>
import jax
import jax.numpy as jnp
from jax.experimental import pallas as pl
from jax.experimental.pallas import tpu as pltpu


def resblock_kernel(x_ref, w1_ref, b1_ref, w2_ref, b2_ref, w3_ref, b3_ref, o_ref):
    x = x_ref[...]  # already f32, lane-dense [tb, lanes]

    # Linear 1 + LeakyReLU(0.1)
    h = jnp.dot(x, w1_ref[...], preferred_element_type=jnp.float32) + b1_ref[...]
    h = jnp.where(h > 0, h, 0.1 * h)

    # Linear 2 + LeakyReLU(0.1)
    h = jnp.dot(h, w2_ref[...], preferred_element_type=jnp.float32) + b2_ref[...]
    h = jnp.where(h > 0, h, 0.1 * h)

    # Linear 3
    h = jnp.dot(h, w3_ref[...], preferred_element_type=jnp.float32) + b3_ref[...]

    # residual add + ReLU ("join") -- lane-dense, unmasked store
    o_ref[...] = jnp.maximum(h + x, 0.0)


def resblock(x, w1, b1, w2, b2, w3, b3, *, max_tile_rows=512):
    """x: [B, ch]; wN: [ch, ch] (PyTorch (out, in) layout); bN: [ch]."""
    B, ch = x.shape
    orig_dtype = x.dtype

    # --- lane packing: fold `pack` batch rows into one 128-lane row ---------
    pack = 128 // ch if (ch <= 128 and 128 % ch == 0) else 1
    lanes = ch * pack

    def pack_w(w):
        wt = w.T.astype(jnp.float32)  # [in, out] so kernel does x @ W.T
        if pack == 1:
            return wt
        # block-diagonal: each ch-wide slice of a packed row sees its own W
        return jnp.kron(jnp.eye(pack, dtype=jnp.float32), wt)  # [lanes, lanes]

    def pack_b(b):
        b = b.astype(jnp.float32)
        return (jnp.tile(b, pack) if pack > 1 else b).reshape(1, lanes)

    w1p, w2p, w3p = pack_w(w1), pack_w(w2), pack_w(w3)
    b1p, b2p, b3p = pack_b(b1), pack_b(b2), pack_b(b3)

    # --- batch tiling: big tiles, few grid steps ----------------------------
    rows = -(-B // pack)  # packed rows needed (ceil)
    if rows <= max_tile_rows:
        tb = rows                     # single grid step; block == full array
    else:
        tb = max_tile_rows            # multiple of 8 -> satisfies (8,128) tiling
        rows = -(-rows // tb) * tb    # round packed rows up to a tile multiple
    pad = rows * pack - B
    if pad:
        x = jnp.concatenate([x, jnp.zeros((pad, ch), x.dtype)], axis=0)
    xp = x.reshape(rows, lanes).astype(jnp.float32)

    grid = (rows // tb,)
    x_spec = pl.BlockSpec((tb, lanes), lambda i: (i, 0))
    # weights/biases are grid-invariant (constant index_map), <= 64 KiB each
    w_spec = pl.BlockSpec((lanes, lanes), lambda i: (0, 0))
    b_spec = pl.BlockSpec((1, lanes), lambda i: (0, 0))

    out = pl.pallas_call(
        resblock_kernel,
        out_shape=jax.ShapeDtypeStruct((rows, lanes), jnp.float32),
        grid_spec=pl.GridSpec(
            grid=grid,
            in_specs=[x_spec, w_spec, b_spec, w_spec, b_spec, w_spec, b_spec],
            out_specs=x_spec,
        ),
        compiler_params=pltpu.CompilerParams(
            dimension_semantics=("parallel",)),
    )(xp, w1p, b1p, w2p, b2p, w3p, b3p)

    out = out.reshape(rows * pack, ch)[:B]
    return out.astype(orig_dtype)


def resblock_ref(x, w1, b1, w2, b2, w3, b3):
    """Pure-JAX reference matching the PyTorch forward."""
    h = x @ w1.T + b1
    h = jnp.where(h > 0, h, 0.1 * h)
    h = h @ w2.T + b2
    h = jnp.where(h > 0, h, 0.1 * h)
    h = h @ w3.T + b3
    return jnp.maximum(h + x, 0.0)


if __name__ == "__main__":
    B, ch = 16, 32  # small shapes consistent with ResBlock(ch=32)

    key = jax.random.PRNGKey(0)
    kx, k1, k2, k3, k4, k5, k6 = jax.random.split(key, 7)

    x = jax.random.normal(kx, (B, ch), dtype=jnp.float32)

    # Deterministic parameter init (uniform in [-1/sqrt(ch), 1/sqrt(ch)], like nn.Linear default).
    bound = 1.0 / (ch ** 0.5)
    w1 = jax.random.uniform(k1, (ch, ch), jnp.float32, -bound, bound)
    b1 = jax.random.uniform(k2, (ch,), jnp.float32, -bound, bound)
    w2 = jax.random.uniform(k3, (ch, ch), jnp.float32, -bound, bound)
    b2 = jax.random.uniform(k4, (ch,), jnp.float32, -bound, bound)
    w3 = jax.random.uniform(k5, (ch, ch), jnp.float32, -bound, bound)
    b3 = jax.random.uniform(k6, (ch,), jnp.float32, -bound, bound)

    out = resblock(x, w1, b1, w2, b2, w3, b3)
    out = jax.block_until_ready(out)

    ref = resblock_ref(x, w1, b1, w2, b2, w3, b3)
    assert out.shape == (B, ch)
    assert jnp.allclose(out, ref, atol=1e-5, rtol=1e-5), "mismatch vs reference"

    print("KERNEL_OK")
</pallas_src>

<mosaic_0001>
module attributes {stable_mosaic.version = 11 : i64} {
  func.func @resblock_kernel(%arg0: i32, %arg1: memref<4x128xf32, #tpu.memory_space<vmem>>, %arg2: memref<128x128xf32, #tpu.memory_space<vmem>>, %arg3: memref<1x128xf32, #tpu.memory_space<vmem>>, %arg4: memref<128x128xf32, #tpu.memory_space<vmem>>, %arg5: memref<1x128xf32, #tpu.memory_space<vmem>>, %arg6: memref<128x128xf32, #tpu.memory_space<vmem>>, %arg7: memref<1x128xf32, #tpu.memory_space<vmem>>, %arg8: memref<4x128xf32, #tpu.memory_space<vmem>>) attributes {dimension_semantics = [#tpu.dimension_semantics<parallel>], iteration_bounds = array<i64: 1>, scalar_prefetch = 0 : i64, scratch_operands = 0 : i64, tpu.core_type = #tpu.core_type<tc>, window_params = [{transform_indices = @transform_0, window_bounds = array<i64: 4, 128>}, {pipeline_mode = #tpu.pipeline_mode<synchronous>, transform_indices = @transform_1, window_bounds = array<i64: 128, 128>}, {pipeline_mode = #tpu.pipeline_mode<synchronous>, transform_indices = @transform_2, window_bounds = array<i64: 1, 128>}, {pipeline_mode = #tpu.pipeline_mode<synchronous>, transform_indices = @transform_3, window_bounds = array<i64: 128, 128>}, {pipeline_mode = #tpu.pipeline_mode<synchronous>, transform_indices = @transform_4, window_bounds = array<i64: 1, 128>}, {pipeline_mode = #tpu.pipeline_mode<synchronous>, transform_indices = @transform_5, window_bounds = array<i64: 128, 128>}, {pipeline_mode = #tpu.pipeline_mode<synchronous>, transform_indices = @transform_6, window_bounds = array<i64: 1, 128>}, {transform_indices = @transform_7, window_bounds = array<i64: 4, 128>}]} {
    %c0 = arith.constant 0 : index
    %c0_0 = arith.constant 0 : index
    %0 = vector.load %arg1[%c0, %c0_0] : memref<4x128xf32, #tpu.memory_space<vmem>>, vector<4x128xf32>
    %c0_1 = arith.constant 0 : index
    %c0_2 = arith.constant 0 : index
    %1 = vector.load %arg2[%c0_1, %c0_2] : memref<128x128xf32, #tpu.memory_space<vmem>>, vector<128x128xf32>
    %cst = arith.constant dense<0.000000e+00> : vector<4x128xf32>
    %2 = tpu.matmul %0, %1, %cst {dimension_numbers = #tpu.dot_dimension_numbers<[1], [0], [0], [1], [0, 0, 1, 1], [], []>} : vector<4x128xf32>, vector<128x128xf32>, vector<4x128xf32> -> vector<4x128xf32>
    %c0_3 = arith.constant 0 : index
    %c0_4 = arith.constant 0 : index
    %3 = vector.load %arg3[%c0_3, %c0_4] : memref<1x128xf32, #tpu.memory_space<vmem>>, vector<1x128xf32>
    %4 = vector.broadcast %3 : vector<1x128xf32> to vector<4x128xf32>
    %5 = arith.addf %2, %4 : vector<4x128xf32>
    %cst_5 = arith.constant 0.000000e+00 : f32
    %6 = vector.broadcast %cst_5 : f32 to vector<4x128xf32>
    %7 = arith.cmpf ogt, %5, %6 : vector<4x128xf32>
    %cst_6 = arith.constant 1.000000e-01 : f32
    %8 = vector.broadcast %cst_6 : f32 to vector<4x128xf32>
    %9 = arith.mulf %8, %5 : vector<4x128xf32>
    %10 = arith.select %7, %5, %9 : vector<4x128xi1>, vector<4x128xf32>
    %c0_7 = arith.constant 0 : index
    %c0_8 = arith.constant 0 : index
    %11 = vector.load %arg4[%c0_7, %c0_8] : memref<128x128xf32, #tpu.memory_space<vmem>>, vector<128x128xf32>
    %cst_9 = arith.constant dense<0.000000e+00> : vector<4x128xf32>
    %12 = tpu.matmul %10, %11, %cst_9 {dimension_numbers = #tpu.dot_dimension_numbers<[1], [0], [0], [1], [0, 0, 1, 1], [], []>} : vector<4x128xf32>, vector<128x128xf32>, vector<4x128xf32> -> vector<4x128xf32>
    %c0_10 = arith.constant 0 : index
    %c0_11 = arith.constant 0 : index
    %13 = vector.load %arg5[%c0_10, %c0_11] : memref<1x128xf32, #tpu.memory_space<vmem>>, vector<1x128xf32>
    %14 = vector.broadcast %13 : vector<1x128xf32> to vector<4x128xf32>
    %15 = arith.addf %12, %14 : vector<4x128xf32>
    %cst_12 = arith.constant 0.000000e+00 : f32
    %16 = vector.broadcast %cst_12 : f32 to vector<4x128xf32>
    %17 = arith.cmpf ogt, %15, %16 : vector<4x128xf32>
    %cst_13 = arith.constant 1.000000e-01 : f32
    %18 = vector.broadcast %cst_13 : f32 to vector<4x128xf32>
    %19 = arith.mulf %18, %15 : vector<4x128xf32>
    %20 = arith.select %17, %15, %19 : vector<4x128xi1>, vector<4x128xf32>
    %c0_14 = arith.constant 0 : index
    %c0_15 = arith.constant 0 : index
    %21 = vector.load %arg6[%c0_14, %c0_15] : memref<128x128xf32, #tpu.memory_space<vmem>>, vector<128x128xf32>
    %cst_16 = arith.constant dense<0.000000e+00> : vector<4x128xf32>
    %22 = tpu.matmul %20, %21, %cst_16 {dimension_numbers = #tpu.dot_dimension_numbers<[1], [0], [0], [1], [0, 0, 1, 1], [], []>} : vector<4x128xf32>, vector<128x128xf32>, vector<4x128xf32> -> vector<4x128xf32>
    %c0_17 = arith.constant 0 : index
    %c0_18 = arith.constant 0 : index
    %23 = vector.load %arg7[%c0_17, %c0_18] : memref<1x128xf32, #tpu.memory_space<vmem>>, vector<1x128xf32>
    %24 = vector.broadcast %23 : vector<1x128xf32> to vector<4x128xf32>
    %25 = arith.addf %22, %24 : vector<4x128xf32>
    %26 = arith.addf %25, %0 : vector<4x128xf32>
    %cst_19 = arith.constant 0.000000e+00 : f32
    %27 = vector.broadcast %cst_19 : f32 to vector<4x128xf32>
    %28 = arith.maximumf %26, %27 : vector<4x128xf32>
    %c0_20 = arith.constant 0 : index
    %c0_21 = arith.constant 0 : index
    %29 = vector.load %arg8[%c0_20, %c0_21] : memref<4x128xf32, #tpu.memory_space<vmem>>, vector<4x128xf32>
    tpu.vector_store %arg8[%c0_20, %c0_21], %28 {strides = array<i32>} : memref<4x128xf32, #tpu.memory_space<vmem>>, vector<4x128xf32>,
    return
  }
  func.func @transform_0(%arg0: i32) -> (i32, i32) {
    %c0_i32 = arith.constant 0 : i32
    %c0_i32_0 = arith.constant 0 : i32
    return %arg0, %c0_i32 : i32, i32
  }
  func.func @transform_1(%arg0: i32) -> (i32, i32) {
    %c0_i32 = arith.constant 0 : i32
    %c0_i32_0 = arith.constant 0 : i32
    %c0_i32_1 = arith.constant 0 : i32
    return %c0_i32, %c0_i32_0 : i32, i32
  }
  func.func @transform_2(%arg0: i32) -> (i32, i32) {
    %c0_i32 = arith.constant 0 : i32
    %c0_i32_0 = arith.constant 0 : i32
    %c0_i32_1 = arith.constant 0 : i32
    return %c0_i32, %c0_i32_0 : i32, i32
  }
  func.func @transform_3(%arg0: i32) -> (i32, i32) {
    %c0_i32 = arith.constant 0 : i32
    %c0_i32_0 = arith.constant 0 : i32
    %c0_i32_1 = arith.constant 0 : i32
    return %c0_i32, %c0_i32_0 : i32, i32
  }
  func.func @transform_4(%arg0: i32) -> (i32, i32) {
    %c0_i32 = arith.constant 0 : i32
    %c0_i32_0 = arith.constant 0 : i32
    %c0_i32_1 = arith.constant 0 : i32
    return %c0_i32, %c0_i32_0 : i32, i32
  }
  func.func @transform_5(%arg0: i32) -> (i32, i32) {
    %c0_i32 = arith.constant 0 : i32
    %c0_i32_0 = arith.constant 0 : i32
    %c0_i32_1 = arith.constant 0 : i32
    return %c0_i32, %c0_i32_0 : i32, i32
  }
  func.func @transform_6(%arg0: i32) -> (i32, i32) {
    %c0_i32 = arith.constant 0 : i32
    %c0_i32_0 = arith.constant 0 : i32
    %c0_i32_1 = arith.constant 0 : i32
    return %c0_i32, %c0_i32_0 : i32, i32
  }
  func.func @transform_7(%arg0: i32) -> (i32, i32) {
    %c0_i32 = arith.constant 0 : i32
    %c0_i32_0 = arith.constant 0 : i32
    return %arg0, %c0_i32 : i32, i32
  }
}

</mosaic_0001>

<llo_original>
// kernel: tpu_custom_call.1
$region0: #{tpu_custom_call.1}
  #allocation0 [shape = 'u32[]', space=smem, size = 0x4, offset = 0x4, fixed_abs, tag = 'smem constant byte address 0x4 - core index']
  #allocation1 [shape = 'u32[144,128]{1,0:T(1,128)}', space=vmem, size = 0x12000, scoped, tag = 'internal scratch']
  %s0 = inlined_call_operand.hbm [shape: f32[4,128], index: 0, kind: input, shape index: {}]
  %s1 = inlined_call_operand.hbm [shape: f32[128,128], index: 1, kind: input, shape index: {}]
  %s2 = inlined_call_operand.vmem [shape: f32[1,128], index: 2, kind: input, shape index: {}]
  %s3 = inlined_call_operand.hbm [shape: f32[128,128], index: 3, kind: input, shape index: {}]
  %s4 = inlined_call_operand.vmem [shape: f32[1,128], index: 4, kind: input, shape index: {}]
  %s5 = inlined_call_operand.hbm [shape: f32[128,128], index: 5, kind: input, shape index: {}]
  %s6 = inlined_call_operand.vmem [shape: f32[1,128], index: 6, kind: input, shape index: {}]
  %s7 = inlined_call_operand.hbm [shape: f32[4,128], index: 7, kind: output, shape index: {}]
  %s8 = sld [smem:[#allocation0]]
  $region54: #{tpu_custom_call.1} parent=0
    _
  %s10 = ssub.s32 1, %s8
  %s11 = scalar_select 0, %s10, %s8
  $region1: #{tpu_custom_call.1} parent=0
    #allocation2 [shape = 'u8[2048]{0}', space=vmem, size = 0x800, scoped, tag = 'input window, operand 0, single buffered']
    #allocation3 [shape = 's32[1]{0}', space=sflag, size = 0x4, scoped, tag = 'scoped memory for tpu_custom_call.1']
    #allocation4 [shape = 's32[1]{0}', space=sflag, size = 0x4, scoped, tag = 'scoped memory for tpu_custom_call.1']
    #allocation5 [shape = 'u8[65536]{0}', space=vmem, size = 0x10000, scoped, tag = 'input window, operand 1, single buffered']
    #allocation6 [shape = 's32[1]{0}', space=sflag, size = 0x4, scoped, tag = 'scoped memory for tpu_custom_call.1']
    #allocation7 [shape = 'u8[65536]{0}', space=vmem, size = 0x10000, scoped, tag = 'input window, operand 3, single buffered']
    #allocation8 [shape = 'u8[65536]{0}', space=vmem, size = 0x10000, scoped, tag = 'input window, operand 5, single buffered']
    #allocation9 [shape = 's32[1]{0}', space=sflag, size = 0x4, scoped, tag = 'scoped memory for tpu_custom_call.1']
    #allocation10 [shape = 'u8[2048]{0}', space=vmem, size = 0x800, scoped, tag = 'output window, operand 0, single buffered']
    %12 = vsyncpa [#allocation3], 0
    %13 = vsyncpa [#allocation6], 0
    %14 = vsyncpa [#allocation9], 0
    %15 = vsyncpa [#allocation4], 0
    // Predicated region
    $region2: #{tpu_custom_call.1} parent=1 // pred_check
      _
    $region3: #{tpu_custom_call.1} parent=1 // pred_check_branch
      %17 = sbr.rel (0) target = $region5
    $region4: #{tpu_custom_call.1} parent=1 // pred_region
      %s19 = ssub.s32 64, 64
      %20 = vsyncadd [#allocation3], %s19
      %s22 = sshll.u32 [#allocation2], 4
      %s23 = int_to_ptr.vmem [resolvable:$true] %s22
      %25 = dma.hbm_to_vmem [thread:$0]  %s0, 64, %s23, [#allocation3]
    $region5: #{tpu_custom_call.1} parent=1 // pred_fallthru
      _
    // Predicated region
    $region6: #{tpu_custom_call.1} parent=1 // pred_check
      _
    $region7: #{tpu_custom_call.1} parent=1 // pred_check_branch
      %27 = sbr.rel (0) target = $region9
    $region8: #{tpu_custom_call.1} parent=1 // pred_region
      %s29 = ssub.s32 2048, 2048
      %30 = vsyncadd [#allocation6], %s29
      %s31 = sshll.u32 [#allocation5], 4
      %s32 = int_to_ptr.vmem [resolvable:$true] %s31
      %37 = dma.hbm_to_vmem [thread:$0]  %s1, 2048, %s32, [#allocation6], 128, 128, 8
    $region9: #{tpu_custom_call.1} parent=1 // pred_fallthru
      _
    // Predicated region
    $region10: #{tpu_custom_call.1} parent=1 // pred_check
      _
    $region11: #{tpu_custom_call.1} parent=1 // pred_check_branch
      %39 = sbr.rel (0) target = $region13
    $region12: #{tpu_custom_call.1} parent=1 // pred_region
      _
    $region13: #{tpu_custom_call.1} parent=1 // pred_fallthru
      _
    // Predicated region
    $region14: #{tpu_custom_call.1} parent=1 // pred_check
      _
    $region15: #{tpu_custom_call.1} parent=1 // pred_check_branch
      %41 = sbr.rel (0) target = $region17
    $region16: #{tpu_custom_call.1} parent=1 // pred_region
      %s43 = ssub.s32 2048, 2048
      %44 = vsyncadd [#allocation6], %s43
      %s45 = sshll.u32 [#allocation7], 4
      %s46 = int_to_ptr.vmem [resolvable:$true] %s45
      %51 = dma.hbm_to_vmem [thread:$0]  %s3, 2048, %s46, [#allocation6], 128, 128, 8
    $region17: #{tpu_custom_call.1} parent=1 // pred_fallthru
      _
    // Predicated region
    $region18: #{tpu_custom_call.1} parent=1 // pred_check
      _
    $region19: #{tpu_custom_call.1} parent=1 // pred_check_branch
      %53 = sbr.rel (0) target = $region21
    $region20: #{tpu_custom_call.1} parent=1 // pred_region
      _
    $region21: #{tpu_custom_call.1} parent=1 // pred_fallthru
      _
    // Predicated region
    $region22: #{tpu_custom_call.1} parent=1 // pred_check
      _
    $region23: #{tpu_custom_call.1} parent=1 // pred_check_branch
      %55 = sbr.rel (0) target = $region25
    $region24: #{tpu_custom_call.1} parent=1 // pred_region
      %s57 = ssub.s32 2048, 2048
      %58 = vsyncadd [#allocation9], %s57
      %s59 = sshll.u32 [#allocation8], 4
      %s60 = int_to_ptr.vmem [resolvable:$true] %s59
      %65 = dma.hbm_to_vmem [thread:$0]  %s5, 2048, %s60, [#allocation9], 128, 128, 8
    $region25: #{tpu_custom_call.1} parent=1 // pred_fallthru
      _
    // Predicated region
    $region26: #{tpu_custom_call.1} parent=1 // pred_check
      _
    $region27: #{tpu_custom_call.1} parent=1 // pred_check_branch
      %67 = sbr.rel (0) target = $region29
    $region28: #{tpu_custom_call.1} parent=1 // pred_region
      _
    $region29: #{tpu_custom_call.1} parent=1 // pred_fallthru
      _
    // Predicated region
    $region30: #{tpu_custom_call.1} parent=1 // pred_check
      _
    $region31: #{tpu_custom_call.1} parent=1 // pred_check_branch
      %69 = sbr.rel (0) target = $region33
    $region32: #{tpu_custom_call.1} parent=1 // pred_region
      %70 = dma.done [#allocation3], 64
    $region33: #{tpu_custom_call.1} parent=1 // pred_fallthru
      _
    // Predicated region
    $region34: #{tpu_custom_call.1} parent=1 // pred_check
      _
    $region35: #{tpu_custom_call.1} parent=1 // pred_check_branch
      %72 = sbr.rel (0) target = $region37
    $region36: #{tpu_custom_call.1} parent=1 // pred_region
      %73 = dma.done [#allocation6], 2048
    $region37: #{tpu_custom_call.1} parent=1 // pred_fallthru
      _
    // Predicated region
    $region38: #{tpu_custom_call.1} parent=1 // pred_check
      _
    $region39: #{tpu_custom_call.1} parent=1 // pred_check_branch
      %75 = sbr.rel (0) target = $region41
    $region40: #{tpu_custom_call.1} parent=1 // pred_region
      %76 = dma.done [#allocation6], 2048
    $region41: #{tpu_custom_call.1} parent=1 // pred_fallthru
      _
    // Predicated region
    $region42: #{tpu_custom_call.1} parent=1 // pred_check
      _
    $region43: #{tpu_custom_call.1} parent=1 // pred_check_branch
      %78 = sbr.rel (0) target = $region45
    $region44: #{tpu_custom_call.1} parent=1 // pred_region
      %79 = dma.done [#allocation9], 2048
    $region45: #{tpu_custom_call.1} parent=1 // pred_fallthru
      _
    %v80 = vld [vmem:[#allocation2] sm:$0xf]
    %v81 = vld [vmem:[#allocation5] sm:$0xff]
    %v82 = vld [vmem:[#allocation5 + $0x8] sm:$0xff]
    %v83 = vld [vmem:[#allocation5 + $0x10] sm:$0xff]
    %v84 = vld [vmem:[#allocation5 + $0x18] sm:$0xff]
    %v85 = vld [vmem:[#allocation5 + $0x20] sm:$0xff]
    %v86 = vld [vmem:[#allocation5 + $0x28] sm:$0xff]
    %v87 = vld [vmem:[#allocation5 + $0x30] sm:$0xff]
    %v88 = vld [vmem:[#allocation5 + $0x38] sm:$0xff]
    %v89 = vld [vmem:[#allocation5 + $0x40] sm:$0xff]
    %v90 = vld [vmem:[#allocation5 + $0x48] sm:$0xff]
    %v91 = vld [vmem:[#allocation5 + $0x50] sm:$0xff]
    %v92 = vld [vmem:[#allocation5 + $0x58] sm:$0xff]
    %v93 = vld [vmem:[#allocation5 + $0x60] sm:$0xff]
    %v94 = vld [vmem:[#allocation5 + $0x68] sm:$0xff]
    %v95 = vld [vmem:[#allocation5 + $0x70] sm:$0xff]
    %v96 = vld [vmem:[#allocation5 + $0x78] sm:$0xff]
    %v97 = vld [vmem:[%s2] sm:$0x1]
    %v99 = vlaneseq
    %v100 = vshrl.u32 %v99, 7
    %v101 = vsub.s32 0, %v100
    %v102 = vrot.slane %v97, %v101
    %104 = vmatprep.subr.mxu0 0.0
    %105 = vmatpush1.msra.mxu0 %v81
    %106 = vmatprep.subr.mxu0 0.0
    %107 = vmatpush1.msra.mxu0 %v82
    %108 = vmatprep.subr.mxu0 0.0
    %109 = vmatpush1.msra.mxu0 %v83
    %110 = vmatprep.subr.mxu0 0.0
    %111 = vmatpush1.msra.mxu0 %v84
    %112 = vmatprep.subr.mxu0 0.0
    %113 = vmatpush1.msra.mxu0 %v85
    %114 = vmatprep.subr.mxu0 0.0
    %115 = vmatpush1.msra.mxu0 %v86
    %116 = vmatprep.subr.mxu0 0.0
    %117 = vmatpush1.msra.mxu0 %v87
    %118 = vmatprep.subr.mxu0 0.0
    %119 = vmatpush1.msra.mxu0 %v88
    %120 = vmatprep.subr.mxu0 0.0
    %121 = vmatpush1.msra.mxu0 %v89
    %122 = vmatprep.subr.mxu0 0.0
    %123 = vmatpush1.msra.mxu0 %v90
    %124 = vmatprep.subr.mxu0 0.0
    %125 = vmatpush1.msra.mxu0 %v91
    %126 = vmatprep.subr.mxu0 0.0
    %127 = vmatpush1.msra.mxu0 %v92
    %128 = vmatprep.subr.mxu0 0.0
    %129 = vmatpush1.msra.mxu0 %v93
    %130 = vmatprep.subr.mxu0 0.0
    %131 = vmatpush1.msra.mxu0 %v94
    %132 = vmatprep.subr.mxu0 0.0
    %133 = vmatpush1.msra.mxu0 %v95
    %134 = vmatprep.subr.mxu0 0.0
    %135 = vmatpush1.msra.mxu0 %v96
    %136 = vmatprep.subr.mxu0 0.0
    %137 = vmatpush1.msra.mxu0 0.0
    %138 = vmatprep.subr.mxu0 0.0
    %139 = vmatpush1.msra.mxu0 0.0
    %140 = vmatprep.subr.mxu0 0.0
    %141 = vmatpush1.msra.mxu0 0.0
    %142 = vmatprep.subr.mxu0 0.0
    %143 = vmatpush1.msra.mxu0 0.0
    %144 = vmatprep.subr.mxu0 0.0
    %145 = vmatpush1.msra.mxu0 0.0
    %146 = vmatprep.subr.mxu0 0.0
    %147 = vmatpush1.msra.mxu0 0.0
    %148 = vmatprep.subr.mxu0 0.0
    %149 = vmatpush1.msra.mxu0 0.0
    %150 = vmatprep.subr.mxu0 0.0
    %151 = vmatpush1.msra.mxu0 0.0
    %152 = vmatprep.subr.mxu0 0.0
    %153 = vmatpush1.msra.mxu0 0.0
    %154 = vmatprep.subr.mxu0 0.0
    %155 = vmatpush1.msra.mxu0 0.0
    %156 = vmatprep.subr.mxu0 0.0
    %157 = vmatpush1.msra.mxu0 0.0
    %158 = vmatprep.subr.mxu0 0.0
    %159 = vmatpush1.msra.mxu0 0.0
    %160 = vmatprep.subr.mxu0 0.0
    %161 = vmatpush1.msra.mxu0 0.0
    %162 = vmatprep.subr.mxu0 0.0
    %163 = vmatpush1.msra.mxu0 0.0
    %164 = vmatprep.subr.mxu0 0.0
    %165 = vmatpush1.msra.mxu0 0.0
    %166 = vmatprep.subr.mxu0 0.0
    %167 = vmatpush1.msra.mxu0 0.0
    %168 = vmatprep.mubr.f32.mxu0 0.0
    %169 = vmatmul.mubr.f32.gmra.mrb[0].mxu0 %v80
    %v170 = vpop.f32.mrb[0].mxu0
    %v171 = vadd.f32 %v102, %v170
    %v172 = vpop.f32.mrb[0].mxu0
    %173 = vdwg.mxu0
    %vm174 = vcmp.gt.f32.partialorder %v171, 0.0
    %v175 = vmul.f32 %v171, 0.1
    %v176 = vsel %vm174, %v171, %v175
    %v177 = vld [vmem:[#allocation7] sm:$0xff]
    %v178 = vld [vmem:[#allocation7 + $0x8] sm:$0xff]
    %v179 = vld [vmem:[#allocation7 + $0x10] sm:$0xff]
    %v180 = vld [vmem:[#allocation7 + $0x18] sm:$0xff]
    %v181 = vld [vmem:[#allocation7 + $0x20] sm:$0xff]
    %v182 = vld [vmem:[#allocation7 + $0x28] sm:$0xff]
    %v183 = vld [vmem:[#allocation7 + $0x30] sm:$0xff]
    %v184 = vld [vmem:[#allocation7 + $0x38] sm:$0xff]
    %v185 = vld [vmem:[#allocation7 + $0x40] sm:$0xff]
    %v186 = vld [vmem:[#allocation7 + $0x48] sm:$0xff]
    %v187 = vld [vmem:[#allocation7 + $0x50] sm:$0xff]
    %v188 = vld [vmem:[#allocation7 + $0x58] sm:$0xff]
    %v189 = vld [vmem:[#allocation7 + $0x60] sm:$0xff]
    %v190 = vld [vmem:[#allocation7 + $0x68] sm:$0xff]
    %v191 = vld [vmem:[#allocation7 + $0x70] sm:$0xff]
    %v192 = vld [vmem:[#allocation7 + $0x78] sm:$0xff]
    %v193 = vld [vmem:[%s4] sm:$0x1]
    %v195 = vlaneseq
    %v196 = vshrl.u32 %v195, 7
    %v197 = vsub.s32 0, %v196
    %v198 = vrot.slane %v193, %v197
    %200 = vmatprep.subr.mxu0 0.0
    %201 = vmatpush1.msra.mxu0 %v177
    %202 = vmatprep.subr.mxu0 0.0
    %203 = vmatpush1.msra.mxu0 %v178
    %204 = vmatprep.subr.mxu0 0.0
    %205 = vmatpush1.msra.mxu0 %v179
    %206 = vmatprep.subr.mxu0 0.0
    %207 = vmatpush1.msra.mxu0 %v180
    %208 = vmatprep.subr.mxu0 0.0
    %209 = vmatpush1.msra.mxu0 %v181
    %210 = vmatprep.subr.mxu0 0.0
    %211 = vmatpush1.msra.mxu0 %v182
    %212 = vmatprep.subr.mxu0 0.0
    %213 = vmatpush1.msra.mxu0 %v183
    %214 = vmatprep.subr.mxu0 0.0
    %215 = vmatpush1.msra.mxu0 %v184
    %216 = vmatprep.subr.mxu0 0.0
    %217 = vmatpush1.msra.mxu0 %v185
    %218 = vmatprep.subr.mxu0 0.0
    %219 = vmatpush1.msra.mxu0 %v186
    %220 = vmatprep.subr.mxu0 0.0
    %221 = vmatpush1.msra.mxu0 %v187
    %222 = vmatprep.subr.mxu0 0.0
    %223 = vmatpush1.msra.mxu0 %v188
    %224 = vmatprep.subr.mxu0 0.0
    %225 = vmatpush1.msra.mxu0 %v189
    %226 = vmatprep.subr.mxu0 0.0
    %227 = vmatpush1.msra.mxu0 %v190
    %228 = vmatprep.subr.mxu0 0.0
    %229 = vmatpush1.msra.mxu0 %v191
    %230 = vmatprep.subr.mxu0 0.0
    %231 = vmatpush1.msra.mxu0 %v192
    %232 = vmatprep.subr.mxu0 0.0
    %233 = vmatpush1.msra.mxu0 0.0
    %234 = vmatprep.subr.mxu0 0.0
    %235 = vmatpush1.msra.mxu0 0.0
    %236 = vmatprep.subr.mxu0 0.0
    %237 = vmatpush1.msra.mxu0 0.0
    %238 = vmatprep.subr.mxu0 0.0
    %239 = vmatpush1.msra.mxu0 0.0
    %240 = vmatprep.subr.mxu0 0.0
    %241 = vmatpush1.msra.mxu0 0.0
    %242 = vmatprep.subr.mxu0 0.0
    %243 = vmatpush1.msra.mxu0 0.0
    %244 = vmatprep.subr.mxu0 0.0
    %245 = vmatpush1.msra.mxu0 0.0
    %246 = vmatprep.subr.mxu0 0.0
    %247 = vmatpush1.msra.mxu0 0.0
    %248 = vmatprep.subr.mxu0 0.0
    %249 = vmatpush1.msra.mxu0 0.0
    %250 = vmatprep.subr.mxu0 0.0
    %251 = vmatpush1.msra.mxu0 0.0
    %252 = vmatprep.subr.mxu0 0.0
    %253 = vmatpush1.msra.mxu0 0.0
    %254 = vmatprep.subr.mxu0 0.0
    %255 = vmatpush1.msra.mxu0 0.0
    %256 = vmatprep.subr.mxu0 0.0
    %257 = vmatpush1.msra.mxu0 0.0
    %258 = vmatprep.subr.mxu0 0.0
    %259 = vmatpush1.msra.mxu0 0.0
    %260 = vmatprep.subr.mxu0 0.0
    %261 = vmatpush1.msra.mxu0 0.0
    %262 = vmatprep.subr.mxu0 0.0
    %263 = vmatpush1.msra.mxu0 0.0
    %264 = vmatprep.mubr.f32.mxu0 0.0
    %265 = vmatmul.mubr.f32.gmra.mrb[0].mxu0 %v176
    %v266 = vpop.f32.mrb[0].mxu0
    %v267 = vadd.f32 %v198, %v266
    %v268 = vpop.f32.mrb[0].mxu0
    %269 = vdwg.mxu0
    %vm270 = vcmp.gt.f32.partialorder %v267, 0.0
    %v271 = vmul.f32 %v267, 0.1
    %v272 = vsel %vm270, %v267, %v271
    %v273 = vld [vmem:[#allocation8] sm:$0xff]
    %v274 = vld [vmem:[#allocation8 + $0x8] sm:$0xff]
    %v275 = vld [vmem:[#allocation8 + $0x10] sm:$0xff]
    %v276 = vld [vmem:[#allocation8 + $0x18] sm:$0xff]
    %v277 = vld [vmem:[#allocation8 + $0x20] sm:$0xff]
    %v278 = vld [vmem:[#allocation8 + $0x28] sm:$0xff]
    %v279 = vld [vmem:[#allocation8 + $0x30] sm:$0xff]
    %v280 = vld [vmem:[#allocation8 + $0x38] sm:$0xff]
    %v281 = vld [vmem:[#allocation8 + $0x40] sm:$0xff]
    %v282 = vld [vmem:[#allocation8 + $0x48] sm:$0xff]
    %v283 = vld [vmem:[#allocation8 + $0x50] sm:$0xff]
    %v284 = vld [vmem:[#allocation8 + $0x58] sm:$0xff]
    %v285 = vld [vmem:[#allocation8 + $0x60] sm:$0xff]
    %v286 = vld [vmem:[#allocation8 + $0x68] sm:$0xff]
    %v287 = vld [vmem:[#allocation8 + $0x70] sm:$0xff]
    %v288 = vld [vmem:[#allocation8 + $0x78] sm:$0xff]
    %v289 = vld [vmem:[%s6] sm:$0x1]
    %v291 = vlaneseq
    %v292 = vshrl.u32 %v291, 7
    %v293 = vsub.s32 0, %v292
    %v294 = vrot.slane %v289, %v293
    %296 = vmatprep.subr.mxu0 0.0
    %297 = vmatpush1.msra.mxu0 %v273
    %298 = vmatprep.subr.mxu0 0.0
    %299 = vmatpush1.msra.mxu0 %v274
    %300 = vmatprep.subr.mxu0 0.0
    %301 = vmatpush1.msra.mxu0 %v275
    %302 = vmatprep.subr.mxu0 0.0
    %303 = vmatpush1.msra.mxu0 %v276
    %304 = vmatprep.subr.mxu0 0.0
    %305 = vmatpush1.msra.mxu0 %v277
    %306 = vmatprep.subr.mxu0 0.0
    %307 = vmatpush1.msra.mxu0 %v278
    %308 = vmatprep.subr.mxu0 0.0
    %309 = vmatpush1.msra.mxu0 %v279
    %310 = vmatprep.subr.mxu0 0.0
    %311 = vmatpush1.msra.mxu0 %v280
    %312 = vmatprep.subr.mxu0 0.0
    %313 = vmatpush1.msra.mxu0 %v281
    %314 = vmatprep.subr.mxu0 0.0
    %315 = vmatpush1.msra.mxu0 %v282
    %316 = vmatprep.subr.mxu0 0.0
    %317 = vmatpush1.msra.mxu0 %v283
    %318 = vmatprep.subr.mxu0 0.0
    %319 = vmatpush1.msra.mxu0 %v284
    %320 = vmatprep.subr.mxu0 0.0
    %321 = vmatpush1.msra.mxu0 %v285
    %322 = vmatprep.subr.mxu0 0.0
    %323 = vmatpush1.msra.mxu0 %v286
    %324 = vmatprep.subr.mxu0 0.0
    %325 = vmatpush1.msra.mxu0 %v287
    %326 = vmatprep.subr.mxu0 0.0
    %327 = vmatpush1.msra.mxu0 %v288
    %328 = vmatprep.subr.mxu0 0.0
    %329 = vmatpush1.msra.mxu0 0.0
    %330 = vmatprep.subr.mxu0 0.0
    %331 = vmatpush1.msra.mxu0 0.0
    %332 = vmatprep.subr.mxu0 0.0
    %333 = vmatpush1.msra.mxu0 0.0
    %334 = vmatprep.subr.mxu0 0.0
    %335 = vmatpush1.msra.mxu0 0.0
    %336 = vmatprep.subr.mxu0 0.0
    %337 = vmatpush1.msra.mxu0 0.0
    %338 = vmatprep.subr.mxu0 0.0
    %339 = vmatpush1.msra.mxu0 0.0
    %340 = vmatprep.subr.mxu0 0.0
    %341 = vmatpush1.msra.mxu0 0.0
    %342 = vmatprep.subr.mxu0 0.0
    %343 = vmatpush1.msra.mxu0 0.0
    %344 = vmatprep.subr.mxu0 0.0
    %345 = vmatpush1.msra.mxu0 0.0
    %346 = vmatprep.subr.mxu0 0.0
    %347 = vmatpush1.msra.mxu0 0.0
    %348 = vmatprep.subr.mxu0 0.0
    %349 = vmatpush1.msra.mxu0 0.0
    %350 = vmatprep.subr.mxu0 0.0
    %351 = vmatpush1.msra.mxu0 0.0
    %352 = vmatprep.subr.mxu0 0.0
    %353 = vmatpush1.msra.mxu0 0.0
    %354 = vmatprep.subr.mxu0 0.0
    %355 = vmatpush1.msra.mxu0 0.0
    %356 = vmatprep.subr.mxu0 0.0
    %357 = vmatpush1.msra.mxu0 0.0
    %358 = vmatprep.subr.mxu0 0.0
    %359 = vmatpush1.msra.mxu0 0.0
    %360 = vmatprep.mubr.f32.mxu0 0.0
    %361 = vmatmul.mubr.f32.gmra.mrb[0].mxu0 %v272
    %v362 = vpop.f32.mrb[0].mxu0
    %v363 = vadd.f32 %v294, %v362
    %v364 = vpop.f32.mrb[0].mxu0
    %365 = vdwg.mxu0
    %v366 = vadd.f32 %v363, %v80
    %v367 = vmax.f32 %v366, 0.0
    %368 = vst [vmem:[#allocation10] sm:$0xf] %v367
    // Predicated region
    $region46: #{tpu_custom_call.1} parent=1 // pred_check
      _
    $region47: #{tpu_custom_call.1} parent=1 // pred_check_branch
      %370 = sbr.rel (0) target = $region49
    $region48: #{tpu_custom_call.1} parent=1 // pred_region
      %s372 = ssub.s32 64, 64
      %373 = vsyncadd [#allocation4], %s372
      %s375 = sshll.u32 [#allocation10], 4
      %s376 = int_to_ptr.vmem [resolvable:$true] %s375
      %378 = dma.vmem_to_hbm [thread:$0]  %s376, 64, %s7, [#allocation4]
    $region49: #{tpu_custom_call.1} parent=1 // pred_fallthru
      _
    // Predicated region
    $region50: #{tpu_custom_call.1} parent=1 // pred_check
      _
    $region51: #{tpu_custom_call.1} parent=1 // pred_check_branch
      %380 = sbr.rel (0) target = $region53
    $region52: #{tpu_custom_call.1} parent=1 // pred_region
      %381 = dma.done [#allocation4], 64
    $region53: #{tpu_custom_call.1} parent=1 // pred_fallthru
      _
    %382 = vsyncpa [#allocation3], 1
    %383 = vsyncpa [#allocation6], 1
    %384 = vsyncpa [#allocation9], 1
    %385 = vsyncpa [#allocation4], 1

</llo_original>
